<compile_context>
chip_gen: v7x
topology: tpu7x:2x2x1
jax: 0.10.0
libtpu: 0.0.40
codegen_flags: <defaults>
</compile_context>

<pallas_src>
import math
import functools

import jax
import jax.numpy as jnp
from jax.experimental import pallas as pl
from jax.experimental.pallas import tpu as pltpu


# ---------------------------------------------------------------------------
# Kernel
# ---------------------------------------------------------------------------
def _memory_kernel(x_ref, w_ref, y_ref, att_ref, *, shrink_thres,
                   approx_recip):
    """One tile of rows.

    x_ref:   (TM, fea_dim)       input rows (HBM dtype; cast in-kernel)
    w_ref:   (mem_dim, fea_dim)  full memory matrix, resident in VMEM
    y_ref:   (TM, fea_dim)       reconstructed output
    att_ref: (TM, mem_dim)       attention weights
    """
    w = w_ref[...]
    x = x_ref[...]
    if x.dtype != w.dtype:
        # In-kernel cast (VPU, hidden under MXU) instead of a wrapper-side
        # XLA convert that would round-trip x through HBM.
        x = x.astype(w.dtype)

    # att_weight = F.linear(input, weight) = x @ W^T.
    # Contract fea_dim of both operands directly: no materialized transpose.
    logits = jax.lax.dot_general(
        x, w, dimension_numbers=(((1,), (1,)), ((), ())),
        preferred_element_type=jnp.float32)

    # Softmax over the memory dimension (dim=1), in f32.
    m = jnp.max(logits, axis=1, keepdims=True)
    e = jnp.exp(logits - m)
    s = jnp.sum(e, axis=1, keepdims=True)
    if approx_recip:
        att = e * pl.reciprocal(s, approx=True)
    else:
        att = e / s

    if shrink_thres > 0:
        # hard_shrink_relu: relu(a - lambd) * a / (|a - lambd| + eps)
        lambd = jnp.float32(shrink_thres)
        eps = jnp.float32(1e-12)
        shifted = att - lambd
        # Exact divide here: the denominator can be ~eps near the threshold,
        # so an approx reciprocal could flip keep/drop decisions.
        att = jnp.maximum(shifted, 0.0) * att / (jnp.abs(shifted) + eps)
        # F.normalize(p=1, dim=1): divide by max(sum |a|, 1e-12)
        denom = jnp.maximum(jnp.sum(jnp.abs(att), axis=1, keepdims=True),
                            jnp.float32(1e-12))
        if approx_recip:
            att = att * pl.reciprocal(denom, approx=True)
        else:
            att = att / denom

    # output = F.linear(att_weight, weight.T) = att @ W.
    y = jax.lax.dot_general(
        att.astype(w.dtype), w, dimension_numbers=(((1,), (0,)), ((), ())),
        preferred_element_type=jnp.float32)
    y_ref[...] = y.astype(y_ref.dtype)
    att_ref[...] = att.astype(att_ref.dtype)


# ---------------------------------------------------------------------------
# Wrapper helpers
# ---------------------------------------------------------------------------
def _round_up(v, m):
    return ((v + m - 1) // m) * m


def _per_core_vmem_bytes():
    """Per-TensorCore VMEM capacity (generation aware)."""
    try:
        info = pltpu.get_tpu_info()
        cap = int(getattr(info, "vmem_capacity_bytes", 0))
        if cap > 0:
            return cap
    except Exception:
        pass
    # Conservative fallback: v7x per-core capacity (smallest of the fleet).
    return 64 * 1024 * 1024


def _pick_tile_rows(n, fea_dim, mem_dim, x_item, out_item, w_bytes,
                    row_multiple, budget):
    """MXU-shaped row tile that fits the per-core VMEM budget."""
    # Per-row VMEM bytes: double-buffered x / y / att tiles + f32 live
    # intermediates (logits, exp, att, y) inside the kernel body.
    per_row = (2 * fea_dim * x_item
               + 2 * fea_dim * out_item
               + 2 * mem_dim * out_item
               + (2 * fea_dim + 2 * mem_dim) * 4)
    tm_budget = (budget - w_bytes) // max(per_row, 1)
    tm_budget = max(row_multiple, int(tm_budget))

    target = 256  # full MXU pass on v6e/v7x (2x256^2); two passes on v5e.
    tm = min(target, tm_budget)
    tm = max(row_multiple, (tm // row_multiple) * row_multiple)
    if n <= tm:
        # Single tile: just round the row count up to the layout multiple.
        tm = max(row_multiple, _round_up(n, row_multiple))
    return tm


# ---------------------------------------------------------------------------
# memory_unit: fused linear->softmax->shrink->normalize->linear
# ---------------------------------------------------------------------------
def memory_unit(x_rows, weight, shrink_thres, *, compute_dtype=jnp.float32,
                out_dtype=None, tile_rows=None, approx_recip=None):
    """x_rows: (n, fea_dim); weight: (mem_dim, fea_dim). Returns (y, att)."""
    n, fea_dim = x_rows.shape
    mem_dim, fea_dim_w = weight.shape
    assert fea_dim_w == fea_dim

    compute_dtype = jnp.dtype(compute_dtype)
    out_dtype = jnp.dtype(out_dtype) if out_dtype is not None else jnp.dtype(
        jnp.float32)
    if approx_recip is None:
        # EUP approx reciprocals are precision-matched to the bf16 MXU path;
        # the f32 path keeps exact divides for strict reference parity.
        approx_recip = compute_dtype != jnp.dtype(jnp.float32)

    # Per-core VMEM budget (64 MiB/TC on v7x, 128 MiB on v5e/v6e), with
    # headroom for compiler-internal scratch and spills.
    vmem_cap = _per_core_vmem_bytes()
    budget = int(vmem_cap * 0.8)

    # Resident (single-buffered) weight in compute dtype.  On tight-VMEM
    # chips a large f32 weight can blow the per-core budget -> drop to bf16.
    w_cast = weight if weight.dtype == compute_dtype else weight.astype(
        compute_dtype)
    w_bytes = mem_dim * fea_dim * w_cast.dtype.itemsize
    if w_cast.dtype == jnp.dtype(jnp.float32) and w_bytes > budget // 4:
        w_cast = weight.astype(jnp.bfloat16)
        w_bytes = mem_dim * fea_dim * 2
    # TODO(synk): stream the weight over fea_dim (second "arbitrary" grid
    # axis + logits accumulator scratch) when it still does not fit VMEM.

    x_item = x_rows.dtype.itemsize      # x stays in its HBM dtype
    out_item = out_dtype.itemsize
    row_multiple = 16 if (w_cast.dtype == jnp.dtype(jnp.bfloat16)
                          or out_dtype == jnp.dtype(jnp.bfloat16)) else 8

    if tile_rows is None:
        tile_rows = _pick_tile_rows(n, fea_dim, mem_dim, x_item, out_item,
                                    w_bytes, row_multiple, budget)

    padded_n = _round_up(n, tile_rows)
    if padded_n != n:
        # Zero-pad the ragged last tile; padded rows produce finite garbage
        # (uniform softmax) and are sliced off below.
        x_rows = jnp.pad(x_rows, ((0, padded_n - n), (0, 0)))
    grid = padded_n // tile_rows

    # Explicit VMEM budget: resident weight + double-buffered x/y/att tiles
    # + f32 intermediates, clamped to the per-core capacity with headroom.
    vmem_bytes = (w_bytes
                  + 2 * tile_rows * fea_dim * x_item
                  + 2 * tile_rows * fea_dim * out_item
                  + 2 * tile_rows * mem_dim * out_item
                  + tile_rows * (2 * fea_dim + 2 * mem_dim) * 4)
    vmem_limit = min(int(vmem_cap * 0.85),
                     max(32 * 1024 * 1024,
                         int(1.25 * vmem_bytes) + (1 << 20)))

    kernel = functools.partial(_memory_kernel, shrink_thres=shrink_thres,
                               approx_recip=bool(approx_recip))

    y, att = pl.pallas_call(
        kernel,
        out_shape=(
            jax.ShapeDtypeStruct((padded_n, fea_dim), out_dtype),
            jax.ShapeDtypeStruct((padded_n, mem_dim), out_dtype),
        ),
        grid_spec=pltpu.PrefetchScalarGridSpec(
            num_scalar_prefetch=0,
            grid=(grid,),
            in_specs=[
                pl.BlockSpec((tile_rows, fea_dim), lambda i: (i, 0)),
                # Whole weight resident in VMEM, single-buffered: its index
                # never changes, so a pipelined BlockSpec would waste a
                # second weight-sized buffer.
                pl.BlockSpec(memory_space=pltpu.MemorySpace.VMEM),
            ],
            out_specs=[
                pl.BlockSpec((tile_rows, fea_dim), lambda i: (i, 0)),
                pl.BlockSpec((tile_rows, mem_dim), lambda i: (i, 0)),
            ],
        ),
        compiler_params=pltpu.CompilerParams(
            dimension_semantics=("parallel",),  # row tiles are independent
            vmem_limit_bytes=vmem_limit,
        ),
    )(x_rows, w_cast)

    if padded_n != n:
        y = y[:n]
        att = att[:n]
    return y, att


# ---------------------------------------------------------------------------
# Module wrapper (JAX port of MemModule1_new)
# ---------------------------------------------------------------------------
class MemModule1New:
    """JAX port of MemModule1_new. Parameters are created deterministically."""

    def __init__(self, mem_dim, fea_dim, window=1, shrink_thres=0.0025,
                 key=jax.random.PRNGKey(0)):
        self.mem_dim = mem_dim
        self.fea_dim = fea_dim
        self.window = window
        self.shrink_thres = shrink_thres
        stdv = 1.0 / math.sqrt(fea_dim)
        self.weight = jax.random.uniform(
            key, (mem_dim, fea_dim), dtype=jnp.float32,
            minval=-stdv, maxval=stdv)
        self._weight_cache = {jnp.dtype(jnp.float32): self.weight}

    def _weight_as(self, dtype):
        dtype = jnp.dtype(dtype)
        if dtype not in self._weight_cache:
            self._weight_cache[dtype] = self.weight.astype(dtype)
        return self._weight_cache[dtype]

    def __call__(self, x, *, compute_dtype=jnp.float32, out_dtype=None):
        # x: (B, C, H, W) NCHW, like PyTorch
        b, c, h, w = x.shape
        window_size = h // self.window
        weight = self._weight_as(compute_dtype)
        if self.window != 1:
            # Block the spatial dims into window x window tiles of size
            # window_size x window_size, each tile flattened to a row.
            xr = x.reshape(b, c, self.window, window_size, self.window,
                           window_size)
            xr = jnp.transpose(xr, (0, 1, 2, 4, 3, 5)).reshape(
                -1, window_size * window_size)
            y, att = memory_unit(xr, weight, self.shrink_thres,
                                 compute_dtype=compute_dtype,
                                 out_dtype=out_dtype)
            y = y.reshape(b, c, self.window, self.window, window_size,
                          window_size)
            y = jnp.transpose(y, (0, 1, 2, 4, 3, 5)).reshape(b, c, h, w)
            att = att.reshape(b, c, self.window, self.window, self.mem_dim)
            att = jnp.transpose(att, (0, 4, 1, 2, 3))
        else:
            xr = x.reshape(b * c, -1)
            y, att = memory_unit(xr, weight, self.shrink_thres,
                                 compute_dtype=compute_dtype,
                                 out_dtype=out_dtype)
            y = y.reshape(b, c, h, w)
            att = att.reshape(b, c, self.mem_dim)
            att = jnp.transpose(att, (0, 2, 1))
        return {"output": y, "att": att}


# ---------------------------------------------------------------------------
# Pure-JAX reference (window=1) for sanity checks
# ---------------------------------------------------------------------------
def _reference(x, weight, shrink_thres):
    b, c, h, w = x.shape
    xr = x.reshape(b * c, -1)
    logits = xr @ weight.T
    att = jax.nn.softmax(logits, axis=1)
    if shrink_thres > 0:
        shifted = att - shrink_thres
        att = jnp.maximum(shifted, 0.0) * att / (jnp.abs(shifted) + 1e-12)
        att = att / jnp.maximum(jnp.sum(jnp.abs(att), axis=1, keepdims=True),
                                1e-12)
    y = (att @ weight).reshape(b, c, h, w)
    att = jnp.transpose(att.reshape(b, c, -1), (0, 2, 1))
    return y, att


if __name__ == "__main__":
    # Small shapes consistent with the module: window=1 => fea_dim = H*W.
    B, C, H, W = 2, 4, 16, 16
    MEM_DIM = 128
    FEA_DIM = H * W  # 256

    key = jax.random.PRNGKey(0)
    kx, kw = jax.random.split(key)
    x = jax.random.normal(kx, (B, C, H, W), dtype=jnp.float32)

    mod = MemModule1New(MEM_DIM, FEA_DIM, window=1, shrink_thres=0.0025,
                        key=kw)

    # f32 path: strict parity with the reference (exact divides in-kernel).
    out = mod(x)
    y = jax.block_until_ready(out["output"])
    att = jax.block_until_ready(out["att"])
    assert y.shape == (B, C, H, W)
    assert att.shape == (B, MEM_DIM, C)

    y_ref, att_ref = _reference(x, mod.weight, mod.shrink_thres)
    assert jnp.allclose(y, y_ref, atol=1e-4, rtol=1e-4)
    assert jnp.allclose(att, att_ref, atol=1e-5, rtol=1e-4)

    # bf16 MXU fast path with bf16 outputs (halved HBM writeback).  Loose
    # tolerance: bf16 rounding can flip near-threshold entries of the
    # hard shrink.
    out16 = mod(x, compute_dtype=jnp.bfloat16, out_dtype=jnp.bfloat16)
    y16 = jax.block_until_ready(out16["output"]).astype(jnp.float32)
    att16 = jax.block_until_ready(out16["att"]).astype(jnp.float32)
    assert y16.shape == y.shape and att16.shape == att.shape
    assert bool(jnp.all(jnp.isfinite(y16)))
    assert bool(jnp.all(jnp.isfinite(att16)))
    assert jnp.allclose(y16, y_ref, atol=3e-2, rtol=5e-2)
    assert jnp.allclose(att16, att_ref, atol=3e-2, rtol=5e-2)

    print("KERNEL_OK")
</pallas_src>

<mosaic_0001>
module attributes {stable_mosaic.version = 11 : i64} {
  func.func @_memory_kernel(%arg0: i32, %arg1: memref<8x256xf32, #tpu.memory_space<vmem>>, %arg2: memref<128x256xf32, #tpu.memory_space<vmem>>, %arg3: memref<8x256xf32, #tpu.memory_space<vmem>>, %arg4: memref<8x128xf32, #tpu.memory_space<vmem>>) attributes {dimension_semantics = [#tpu.dimension_semantics<parallel>], iteration_bounds = array<i64: 1>, scalar_prefetch = 0 : i64, scratch_operands = 0 : i64, tpu.core_type = #tpu.core_type<tc>, window_params = [{transform_indices = @transform_0, window_bounds = array<i64: 8, 256>}, {pipeline_mode = #tpu.pipeline_mode<synchronous>, transform_indices = @transform_1, window_bounds = array<i64: 128, 256>}, {transform_indices = @transform_2, window_bounds = array<i64: 8, 256>}, {transform_indices = @transform_3, window_bounds = array<i64: 8, 128>}]} {
    %c0 = arith.constant 0 : index
    %c0_0 = arith.constant 0 : index
    %0 = vector.load %arg2[%c0, %c0_0] : memref<128x256xf32, #tpu.memory_space<vmem>>, vector<128x256xf32>
    %c0_1 = arith.constant 0 : index
    %c0_2 = arith.constant 0 : index
    %1 = vector.load %arg1[%c0_1, %c0_2] : memref<8x256xf32, #tpu.memory_space<vmem>>, vector<8x256xf32>
    %cst = arith.constant dense<0.000000e+00> : vector<8x128xf32>
    %2 = tpu.matmul %1, %0, %cst {dimension_numbers = #tpu.dot_dimension_numbers<[1], [1], [0], [0], [0, 0, 1, 0], [], []>} : vector<8x256xf32>, vector<128x256xf32>, vector<8x128xf32> -> vector<8x128xf32>
    %cst_3 = arith.constant dense<0xFF800000> : vector<8xf32>
    %3 = vector.multi_reduction <maximumf>, %2, %cst_3 [1] : vector<8x128xf32> to vector<8xf32>
    %4 = vector.shape_cast %3 : vector<8xf32> to vector<8x1xf32>
    %5 = vector.broadcast %4 : vector<8x1xf32> to vector<8x128xf32>
    %6 = arith.subf %2, %5 : vector<8x128xf32>
    %7 = math.exp %6 : vector<8x128xf32>
    %cst_4 = arith.constant dense<0.000000e+00> : vector<8xf32>
    %8 = vector.multi_reduction <add>, %7, %cst_4 [1] : vector<8x128xf32> to vector<8xf32>
    %9 = vector.shape_cast %8 : vector<8xf32> to vector<8x1xf32>
    %10 = vector.broadcast %9 : vector<8x1xf32> to vector<8x128xf32>
    %11 = arith.divf %7, %10 : vector<8x128xf32>
    %cst_5 = arith.constant 2.500000e-03 : f32
    %12 = vector.broadcast %cst_5 : f32 to vector<8x128xf32>
    %13 = arith.subf %11, %12 : vector<8x128xf32>
    %cst_6 = arith.constant 0.000000e+00 : f32
    %14 = vector.broadcast %cst_6 : f32 to vector<8x128xf32>
    %15 = arith.maximumf %13, %14 : vector<8x128xf32>
    %16 = arith.mulf %15, %11 : vector<8x128xf32>
    %17 = math.absf %13 : vector<8x128xf32>
    %cst_7 = arith.constant 9.99999996E-13 : f32
    %18 = vector.broadcast %cst_7 : f32 to vector<8x128xf32>
    %19 = arith.addf %17, %18 : vector<8x128xf32>
    %20 = arith.divf %16, %19 : vector<8x128xf32>
    %21 = math.absf %20 : vector<8x128xf32>
    %cst_8 = arith.constant dense<0.000000e+00> : vector<8xf32>
    %22 = vector.multi_reduction <add>, %21, %cst_8 [1] : vector<8x128xf32> to vector<8xf32>
    %23 = vector.shape_cast %22 : vector<8xf32> to vector<8x1xf32>
    %cst_9 = arith.constant 9.99999996E-13 : f32
    %24 = vector.broadcast %cst_9 : f32 to vector<8x1xf32>
    %25 = arith.maximumf %23, %24 : vector<8x1xf32>
    %26 = vector.broadcast %25 : vector<8x1xf32> to vector<8x128xf32>
    %27 = arith.divf %20, %26 : vector<8x128xf32>
    %cst_10 = arith.constant dense<0.000000e+00> : vector<8x256xf32>
    %28 = tpu.matmul %27, %0, %cst_10 {dimension_numbers = #tpu.dot_dimension_numbers<[1], [0], [0], [1], [0, 0, 1, 1], [], []>} : vector<8x128xf32>, vector<128x256xf32>, vector<8x256xf32> -> vector<8x256xf32>
    %c0_11 = arith.constant 0 : index
    %c0_12 = arith.constant 0 : index
    %29 = vector.load %arg3[%c0_11, %c0_12] : memref<8x256xf32, #tpu.memory_space<vmem>>, vector<8x256xf32>
    tpu.vector_store %arg3[%c0_11, %c0_12], %28 {strides = array<i32>} : memref<8x256xf32, #tpu.memory_space<vmem>>, vector<8x256xf32>,
    %c0_13 = arith.constant 0 : index
    %c0_14 = arith.constant 0 : index
    %30 = vector.load %arg4[%c0_13, %c0_14] : memref<8x128xf32, #tpu.memory_space<vmem>>, vector<8x128xf32>
    tpu.vector_store %arg4[%c0_13, %c0_14], %27 {strides = array<i32>} : memref<8x128xf32, #tpu.memory_space<vmem>>, vector<8x128xf32>,
    return
  }
  func.func @transform_0(%arg0: i32) -> (i32, i32) {
    %c0_i32 = arith.constant 0 : i32
    %c0_i32_0 = arith.constant 0 : i32
    return %arg0, %c0_i32 : i32, i32
  }
  func.func @transform_1(%arg0: i32) -> (i32, i32) {
    %c0_i32 = arith.constant 0 : i32
    %c0_i32_0 = arith.constant 0 : i32
    %c0_i32_1 = arith.constant 0 : i32
    return %c0_i32, %c0_i32_0 : i32, i32
  }
  func.func @transform_2(%arg0: i32) -> (i32, i32) {
    %c0_i32 = arith.constant 0 : i32
    %c0_i32_0 = arith.constant 0 : i32
    return %arg0, %c0_i32 : i32, i32
  }
  func.func @transform_3(%arg0: i32) -> (i32, i32) {
    %c0_i32 = arith.constant 0 : i32
    %c0_i32_0 = arith.constant 0 : i32
    return %arg0, %c0_i32 : i32, i32
  }
}

</mosaic_0001>

<llo_original>
// kernel: tpu_custom_call.1
$region0: #{tpu_custom_call.1}
  #allocation0 [shape = 'u32[]', space=smem, size = 0x4, offset = 0x4, fixed_abs, tag = 'smem constant byte address 0x4 - core index']
  #allocation1 [shape = 'u32[144,128]{1,0:T(1,128)}', space=vmem, size = 0x12000, scoped, tag = 'internal scratch']
  %s0 = inlined_call_operand.hbm [shape: f32[8,256], index: 0, kind: input, shape index: {}]
  %s1 = inlined_call_operand.hbm [shape: f32[128,256], index: 1, kind: input, shape index: {}]
  %s2 = inlined_call_operand.hbm [shape: f32[8,256], index: 2, kind: output, shape index: {0}]
  %s3 = inlined_call_operand.hbm [shape: f32[8,128], index: 3, kind: output, shape index: {1}]
  %4 = xla_tuple %s2, %s3
  %s5 = sld [smem:[#allocation0]]
  $region34: #{tpu_custom_call.1} parent=0
    _
  %s7 = ssub.s32 1, %s5
  %s8 = scalar_select 0, %s7, %s5
  $region1: #{tpu_custom_call.1} parent=0
    #allocation2 [shape = 'u8[8192]{0}', space=vmem, size = 0x2000, scoped, tag = 'input window, operand 0, single buffered']
    #allocation3 [shape = 's32[1]{0}', space=sflag, size = 0x4, scoped, tag = 'scoped memory for tpu_custom_call.1']
    #allocation4 [shape = 's32[1]{0}', space=sflag, size = 0x4, scoped, tag = 'scoped memory for tpu_custom_call.1']
    #allocation5 [shape = 'u8[131072]{0}', space=vmem, size = 0x20000, scoped, tag = 'input window, operand 1, single buffered']
    #allocation6 [shape = 's32[1]{0}', space=sflag, size = 0x4, scoped, tag = 'scoped memory for tpu_custom_call.1']
    #allocation7 [shape = 'u8[8192]{0}', space=vmem, size = 0x2000, scoped, tag = 'output window, operand 0, single buffered']
    #allocation8 [shape = 'u8[4096]{0}', space=vmem, size = 0x1000, scoped, tag = 'output window, operand 1, single buffered']
    #allocation9 [shape = 's32[1]{0}', space=sflag, size = 0x4, scoped, tag = 'scoped memory for tpu_custom_call.1']
    %9 = vsyncpa [#allocation3], 0
    %10 = vsyncpa [#allocation6], 0
    %11 = vsyncpa [#allocation4], 0
    %12 = vsyncpa [#allocation9], 0
    // Predicated region
    $region2: #{tpu_custom_call.1} parent=1 // pred_check
      _
    $region3: #{tpu_custom_call.1} parent=1 // pred_check_branch
      %14 = sbr.rel (0) target = $region5
    $region4: #{tpu_custom_call.1} parent=1 // pred_region
      %s16 = ssub.s32 256, 256
      %17 = vsyncadd [#allocation3], %s16
      %s19 = sshll.u32 [#allocation2], 4
      %s20 = int_to_ptr.vmem [resolvable:$true] %s19
      %22 = dma.hbm_to_vmem [thread:$0]  %s0, 256, %s20, [#allocation3]
    $region5: #{tpu_custom_call.1} parent=1 // pred_fallthru
      _
    // Predicated region
    $region6: #{tpu_custom_call.1} parent=1 // pred_check
      _
    $region7: #{tpu_custom_call.1} parent=1 // pred_check_branch
      %24 = sbr.rel (0) target = $region9
    $region8: #{tpu_custom_call.1} parent=1 // pred_region
      %s26 = ssub.s32 4096, 4096
      %27 = vsyncadd [#allocation6], %s26
      %s28 = sshll.u32 [#allocation5], 4
      %s29 = int_to_ptr.vmem [resolvable:$true] %s28
      %34 = dma.hbm_to_vmem [thread:$0]  %s1, 4096, %s29, [#allocation6], 256, 256, 16
    $region9: #{tpu_custom_call.1} parent=1 // pred_fallthru
      _
    // Predicated region
    $region10: #{tpu_custom_call.1} parent=1 // pred_check
      _
    $region11: #{tpu_custom_call.1} parent=1 // pred_check_branch
      %36 = sbr.rel (0) target = $region13
    $region12: #{tpu_custom_call.1} parent=1 // pred_region
      %37 = dma.done [#allocation3], 256
    $region13: #{tpu_custom_call.1} parent=1 // pred_fallthru
      _
    // Predicated region
    $region14: #{tpu_custom_call.1} parent=1 // pred_check
      _
    $region15: #{tpu_custom_call.1} parent=1 // pred_check_branch
      %39 = sbr.rel (0) target = $region17
    $region16: #{tpu_custom_call.1} parent=1 // pred_region
      %40 = dma.done [#allocation6], 4096
    $region17: #{tpu_custom_call.1} parent=1 // pred_fallthru
      _
    %v41 = vld [vmem:[#allocation5] sm:$0xff]
    %v42 = vld [vmem:[#allocation5 + $0x8] sm:$0xff]
    %v43 = vld [vmem:[#allocation5 + $0x10] sm:$0xff]
    %v44 = vld [vmem:[#allocation5 + $0x18] sm:$0xff]
    %v45 = vld [vmem:[#allocation5 + $0x20] sm:$0xff]
    %v46 = vld [vmem:[#allocation5 + $0x28] sm:$0xff]
    %v47 = vld [vmem:[#allocation5 + $0x30] sm:$0xff]
    %v48 = vld [vmem:[#allocation5 + $0x38] sm:$0xff]
    %v49 = vld [vmem:[#allocation5 + $0x40] sm:$0xff]
    %v50 = vld [vmem:[#allocation5 + $0x48] sm:$0xff]
    %v51 = vld [vmem:[#allocation5 + $0x50] sm:$0xff]
    %v52 = vld [vmem:[#allocation5 + $0x58] sm:$0xff]
    %v53 = vld [vmem:[#allocation5 + $0x60] sm:$0xff]
    %v54 = vld [vmem:[#allocation5 + $0x68] sm:$0xff]
    %v55 = vld [vmem:[#allocation5 + $0x70] sm:$0xff]
    %v56 = vld [vmem:[#allocation5 + $0x78] sm:$0xff]
    %v57 = vld [vmem:[#allocation5 + $0x80] sm:$0xff]
    %v58 = vld [vmem:[#allocation5 + $0x88] sm:$0xff]
    %v59 = vld [vmem:[#allocation5 + $0x90] sm:$0xff]
    %v60 = vld [vmem:[#allocation5 + $0x98] sm:$0xff]
    %v61 = vld [vmem:[#allocation5 + $0xa0] sm:$0xff]
    %v62 = vld [vmem:[#allocation5 + $0xa8] sm:$0xff]
    %v63 = vld [vmem:[#allocation5 + $0xb0] sm:$0xff]
    %v64 = vld [vmem:[#allocation5 + $0xb8] sm:$0xff]
    %v65 = vld [vmem:[#allocation5 + $0xc0] sm:$0xff]
    %v66 = vld [vmem:[#allocation5 + $0xc8] sm:$0xff]
    %v67 = vld [vmem:[#allocation5 + $0xd0] sm:$0xff]
    %v68 = vld [vmem:[#allocation5 + $0xd8] sm:$0xff]
    %v69 = vld [vmem:[#allocation5 + $0xe0] sm:$0xff]
    %v70 = vld [vmem:[#allocation5 + $0xe8] sm:$0xff]
    %v71 = vld [vmem:[#allocation5 + $0xf0] sm:$0xff]
    %v72 = vld [vmem:[#allocation5 + $0xf8] sm:$0xff]
    %v73 = vld [vmem:[#allocation2] sm:$0xff]
    %v74 = vld [vmem:[#allocation2 + $0x8] sm:$0xff]
    %75 = vmatprep.subr.mxu0 %v42
    %76 = vmatpush1.xpose.msra.mxu0 %v41
    %77 = vmatprep.subr.mxu0 %v44
    %78 = vmatpush1.xpose.msra.mxu0 %v43
    %79 = vmatprep.subr.mxu0 %v46
    %80 = vmatpush1.xpose.msra.mxu0 %v45
    %81 = vmatprep.subr.mxu0 %v48
    %82 = vmatpush1.xpose.msra.mxu0 %v47
    %83 = vmatprep.subr.mxu0 %v50
    %84 = vmatpush1.xpose.msra.mxu0 %v49
    %85 = vmatprep.subr.mxu0 %v52
    %86 = vmatpush1.xpose.msra.mxu0 %v51
    %87 = vmatprep.subr.mxu0 %v54
    %88 = vmatpush1.xpose.msra.mxu0 %v53
    %89 = vmatprep.subr.mxu0 %v56
    %90 = vmatpush1.xpose.msra.mxu0 %v55
    %91 = vmatprep.subr.mxu0 %v58
    %92 = vmatpush1.xpose.msra.mxu0 %v57
    %93 = vmatprep.subr.mxu0 %v60
    %94 = vmatpush1.xpose.msra.mxu0 %v59
    %95 = vmatprep.subr.mxu0 %v62
    %96 = vmatpush1.xpose.msra.mxu0 %v61
    %97 = vmatprep.subr.mxu0 %v64
    %98 = vmatpush1.xpose.msra.mxu0 %v63
    %99 = vmatprep.subr.mxu0 %v66
    %100 = vmatpush1.xpose.msra.mxu0 %v65
    %101 = vmatprep.subr.mxu0 %v68
    %102 = vmatpush1.xpose.msra.mxu0 %v67
    %103 = vmatprep.subr.mxu0 %v70
    %104 = vmatpush1.xpose.msra.mxu0 %v69
    %105 = vmatprep.subr.mxu0 %v72
    %106 = vmatpush1.xpose.msra.mxu0 %v71
    %107 = vmatprep.subr.mxu0 0.0
    %108 = vmatpush1.xpose.msra.mxu0 0.0
    %109 = vmatprep.subr.mxu0 0.0
    %110 = vmatpush1.xpose.msra.mxu0 0.0
    %111 = vmatprep.subr.mxu0 0.0
    %112 = vmatpush1.xpose.msra.mxu0 0.0
    %113 = vmatprep.subr.mxu0 0.0
    %114 = vmatpush1.xpose.msra.mxu0 0.0
    %115 = vmatprep.subr.mxu0 0.0
    %116 = vmatpush1.xpose.msra.mxu0 0.0
    %117 = vmatprep.subr.mxu0 0.0
    %118 = vmatpush1.xpose.msra.mxu0 0.0
    %119 = vmatprep.subr.mxu0 0.0
    %120 = vmatpush1.xpose.msra.mxu0 0.0
    %121 = vmatprep.subr.mxu0 0.0
    %122 = vmatpush1.xpose.msra.mxu0 0.0
    %123 = vmatprep.subr.mxu0 0.0
    %124 = vmatpush1.xpose.msra.mxu0 0.0
    %125 = vmatprep.subr.mxu0 0.0
    %126 = vmatpush1.xpose.msra.mxu0 0.0
    %127 = vmatprep.subr.mxu0 0.0
    %128 = vmatpush1.xpose.msra.mxu0 0.0
    %129 = vmatprep.subr.mxu0 0.0
    %130 = vmatpush1.xpose.msra.mxu0 0.0
    %131 = vmatprep.subr.mxu0 0.0
    %132 = vmatpush1.xpose.msra.mxu0 0.0
    %133 = vmatprep.subr.mxu0 0.0
    %134 = vmatpush1.xpose.msra.mxu0 0.0
    %135 = vmatprep.subr.mxu0 0.0
    %136 = vmatpush1.xpose.msra.mxu0 0.0
    %137 = vmatprep.subr.mxu0 0.0
    %138 = vmatpush1.xpose.msra.mxu0 0.0
    %139 = vmatprep.mubr.f32.mxu0 %v74
    %140 = vmatmul.mubr.f32.gmra.mrb[0].mxu0 %v73
    %v141 = vpop.f32.mrb[0].mxu0
    %v142 = vadd.f32 0.0, %v141
    %v143 = vpop.f32.mrb[0].mxu0
    %144 = vdwg.mxu0
    %145 = vmax.xlane.f32.xlu0 %v142
    %v146 = vpop.xlane.xlu0 %145
    %v147 = vsub.f32 %v142, %v146
    %v148 = vmul.f32 %v147, 1.442695
    %v149 = vpow.pop %v148
    %150 = vadd.xlane.f32.xlu0 %v149
    %v151 = vpop.xlane.xlu0 %150
    %v152 = vrcp.pop %v151
    %v153 = vmul.f32 %v149, %v152
    %v154 = vsub.f32 %v153, 0.0025
    %v155 = vmax.f32 %v154, 0.0
    %v156 = vmul.f32 %v155, %v153
    %v157 = vand.u32 2147483647, %v154
    %v158 = vadd.f32 %v157, 1e-12
    %v159 = vrcp.pop %v158
    %v160 = vmul.f32 %v156, %v159
    %v161 = vand.u32 2147483647, %v160
    %162 = vadd.xlane.f32.xlu0 %v161
    %v163 = vpop.xlane.xlu0 %162
    %v164 = vmax.f32 %v163, 1e-12
    %v165 = vrcp.pop %v164
    %v166 = vmul.f32 %v160, %v165
    %167 = vmatprep.subr.mxu0 %v42
    %168 = vmatpush1.msra.mxu0 %v41
    %169 = vmatprep.subr.mxu0 %v44
    %170 = vmatpush1.msra.mxu0 %v43
    %171 = vmatprep.subr.mxu0 %v46
    %172 = vmatpush1.msra.mxu0 %v45
    %173 = vmatprep.subr.mxu0 %v48
    %174 = vmatpush1.msra.mxu0 %v47
    %175 = vmatprep.subr.mxu0 %v50
    %176 = vmatpush1.msra.mxu0 %v49
    %177 = vmatprep.subr.mxu0 %v52
    %178 = vmatpush1.msra.mxu0 %v51
    %179 = vmatprep.subr.mxu0 %v54
    %180 = vmatpush1.msra.mxu0 %v53
    %181 = vmatprep.subr.mxu0 %v56
    %182 = vmatpush1.msra.mxu0 %v55
    %183 = vmatprep.subr.mxu0 %v58
    %184 = vmatpush1.msra.mxu0 %v57
    %185 = vmatprep.subr.mxu0 %v60
    %186 = vmatpush1.msra.mxu0 %v59
    %187 = vmatprep.subr.mxu0 %v62
    %188 = vmatpush1.msra.mxu0 %v61
    %189 = vmatprep.subr.mxu0 %v64
    %190 = vmatpush1.msra.mxu0 %v63
    %191 = vmatprep.subr.mxu0 %v66
    %192 = vmatpush1.msra.mxu0 %v65
    %193 = vmatprep.subr.mxu0 %v68
    %194 = vmatpush1.msra.mxu0 %v67
    %195 = vmatprep.subr.mxu0 %v70
    %196 = vmatpush1.msra.mxu0 %v69
    %197 = vmatprep.subr.mxu0 %v72
    %198 = vmatpush1.msra.mxu0 %v71
    %199 = vmatprep.subr.mxu0 0.0
    %200 = vmatpush1.msra.mxu0 0.0
    %201 = vmatprep.subr.mxu0 0.0
    %202 = vmatpush1.msra.mxu0 0.0
    %203 = vmatprep.subr.mxu0 0.0
    %204 = vmatpush1.msra.mxu0 0.0
    %205 = vmatprep.subr.mxu0 0.0
    %206 = vmatpush1.msra.mxu0 0.0
    %207 = vmatprep.subr.mxu0 0.0
    %208 = vmatpush1.msra.mxu0 0.0
    %209 = vmatprep.subr.mxu0 0.0
    %210 = vmatpush1.msra.mxu0 0.0
    %211 = vmatprep.subr.mxu0 0.0
    %212 = vmatpush1.msra.mxu0 0.0
    %213 = vmatprep.subr.mxu0 0.0
    %214 = vmatpush1.msra.mxu0 0.0
    %215 = vmatprep.subr.mxu0 0.0
    %216 = vmatpush1.msra.mxu0 0.0
    %217 = vmatprep.subr.mxu0 0.0
    %218 = vmatpush1.msra.mxu0 0.0
    %219 = vmatprep.subr.mxu0 0.0
    %220 = vmatpush1.msra.mxu0 0.0
    %221 = vmatprep.subr.mxu0 0.0
    %222 = vmatpush1.msra.mxu0 0.0
    %223 = vmatprep.subr.mxu0 0.0
    %224 = vmatpush1.msra.mxu0 0.0
    %225 = vmatprep.subr.mxu0 0.0
    %226 = vmatpush1.msra.mxu0 0.0
    %227 = vmatprep.subr.mxu0 0.0
    %228 = vmatpush1.msra.mxu0 0.0
    %229 = vmatprep.subr.mxu0 0.0
    %230 = vmatpush1.msra.mxu0 0.0
    %231 = vmatprep.mubr.f32.mxu0 0.0
    %232 = vmatmul.mubr.f32.gmra.mrb[0].mxu0 %v166
    %v233 = vpop.f32.mrb[0].mxu0
    %v234 = vadd.f32 0.0, %v233
    %v235 = vpop.f32.mrb[0].mxu0
    %v236 = vadd.f32 0.0, %v235
    %237 = vdwg.mxu0
    %238 = vst [vmem:[#allocation7] sm:$0xff] %v234
    %239 = vst [vmem:[#allocation7 + $0x8] sm:$0xff] %v236
    %240 = vst [vmem:[#allocation8] sm:$0xff] %v166
    // Predicated region
    $region18: #{tpu_custom_call.1} parent=1 // pred_check
      _
    $region19: #{tpu_custom_call.1} parent=1 // pred_check_branch
      %242 = sbr.rel (0) target = $region21
    $region20: #{tpu_custom_call.1} parent=1 // pred_region
      %s244 = ssub.s32 256, 256
      %245 = vsyncadd [#allocation4], %s244
      %s247 = sshll.u32 [#allocation7], 4
      %s248 = int_to_ptr.vmem [resolvable:$true] %s247
      %250 = dma.vmem_to_hbm [thread:$0]  %s248, 256, %s2, [#allocation4]
    $region21: #{tpu_custom_call.1} parent=1 // pred_fallthru
      _
    // Predicated region
    $region22: #{tpu_custom_call.1} parent=1 // pred_check
      _
    $region23: #{tpu_custom_call.1} parent=1 // pred_check_branch
      %252 = sbr.rel (0) target = $region25
    $region24: #{tpu_custom_call.1} parent=1 // pred_region
      %s254 = ssub.s32 128, 128
      %255 = vsyncadd [#allocation9], %s254
      %s257 = sshll.u32 [#allocation8], 4
      %s258 = int_to_ptr.vmem [resolvable:$true] %s257
      %260 = dma.vmem_to_hbm [thread:$0]  %s258, 128, %s3, [#allocation9]
    $region25: #{tpu_custom_call.1} parent=1 // pred_fallthru
      _
    // Predicated region
    $region26: #{tpu_custom_call.1} parent=1 // pred_check
      _
    $region27: #{tpu_custom_call.1} parent=1 // pred_check_branch
      %262 = sbr.rel (0) target = $region29
    $region28: #{tpu_custom_call.1} parent=1 // pred_region
      %263 = dma.done [#allocation4], 256
    $region29: #{tpu_custom_call.1} parent=1 // pred_fallthru
      _
    // Predicated region
    $region30: #{tpu_custom_call.1} parent=1 // pred_check
      _
    $region31: #{tpu_custom_call.1} parent=1 // pred_check_branch
      %265 = sbr.rel (0) target = $region33
    $region32: #{tpu_custom_call.1} parent=1 // pred_region
      %266 = dma.done [#allocation9], 128
    $region33: #{tpu_custom_call.1} parent=1 // pred_fallthru
      _
    %267 = vsyncpa [#allocation3], 1
    %268 = vsyncpa [#allocation6], 1
    %269 = vsyncpa [#allocation4], 1
    %270 = vsyncpa [#allocation9], 1

</llo_original>
